<compile_context>
chip_gen: v6e
topology: v6e:2x2x1
jax: 0.10.0
libtpu: 0.0.40
codegen_flags: <defaults>
</compile_context>

<pallas_src>
import jax
import jax.numpy as jnp
from jax.experimental import pallas as pl
from jax.experimental.pallas import tpu as pltpu


def continuous_problem_kernel(f_q_ref, f_d_ref, m_ref, a_ref, xh_ref):
    # Batch dim is Squeezed() out of every ref: shapes below are per-instance.
    f32 = jnp.float32
    n = m_ref.shape[0]

    # ---- numerically-stable row-softmax of m ----
    m = m_ref[...]                                         # (N, N)
    m_max = jnp.max(m, axis=1, keepdims=True)              # (N, 1)
    e_m = jnp.exp(m - m_max)                               # (N, N), EUP

    # Row sums via a plain MXU matmul against a ones column (no transpose, no XLU
    # cross-lane reduce of 16 vregs).
    ones_col = jnp.ones((n, 1), dtype=f32)
    s = jnp.dot(e_m, ones_col, preferred_element_type=f32)  # (N, 1)
    p = e_m * (1.0 / s)                                      # (N, N), exact; lane-broadcast

    # ---- x_c = f_d @ p ----
    x_c = jnp.dot(f_d_ref[...], p, preferred_element_type=f32)   # (C, N), MXU

    # ---- a = softmax(a_param, dim=-1) on a (1, N) row ----
    a_log = a_ref[...]                                      # (1, N)
    a_max = jnp.max(a_log, axis=1, keepdims=True)
    e_a = jnp.exp(a_log - a_max)
    a = e_a / jnp.sum(e_a, axis=1, keepdims=True)           # exact

    # ---- x_h = lerp(f_q, x_c, a); a broadcasts over the C rows ----
    f_q = f_q_ref[...]                                      # (C, N)
    xh_ref[...] = (f_q + a * (x_c - f_q)).astype(xh_ref.dtype)


@jax.jit
def continuous_problem_forward(f_q, f_d, m, a, w_cls, b_cls):
    """Batched forward over B independent ContinuousProblem instances.

    f_q, f_d: (B, C, N); m: (B, N, N); a: (B, N);
    w_cls: (K, C*N) (torch nn.Linear layout); b_cls: (K,).
    Returns x: (B, K) and x_h: (B, C, N).
    """
    B, C, N = f_q.shape
    a3 = a.reshape(B, 1, N)

    x_h = pl.pallas_call(
        continuous_problem_kernel,
        out_shape=jax.ShapeDtypeStruct((B, C, N), f_q.dtype),
        grid=(B,),
        in_specs=[
            pl.BlockSpec((pl.Squeezed(), C, N), lambda b: (b, 0, 0)),  # f_q
            pl.BlockSpec((pl.Squeezed(), C, N), lambda b: (b, 0, 0)),  # f_d
            pl.BlockSpec((pl.Squeezed(), N, N), lambda b: (b, 0, 0)),  # m
            pl.BlockSpec((pl.Squeezed(), 1, N), lambda b: (b, 0, 0)),  # a as (1, N)
        ],
        out_specs=pl.BlockSpec((pl.Squeezed(), C, N), lambda b: (b, 0, 0)),
        compiler_params=pltpu.CompilerParams(
            dimension_semantics=("parallel",)),   # shards instances across TCs on v7x
    )(f_q, f_d, m, a3)

    # Batched classifier GEMM left to XLA on the contiguous x_h output
    # (row-major flatten is free): (B, C*N) @ (C*N, K).
    x = x_h.reshape(B, C * N) @ w_cls.T + b_cls[None, :]
    return x, x_h


def _reference(f_q, f_d, m, a, w_cls, b_cls):
    def one(f_q_i, f_d_i, m_i, a_i):
        p = jax.nn.softmax(m_i, axis=1)
        aa = jax.nn.softmax(a_i, axis=-1)
        x_c = f_d_i @ p
        x_h = f_q_i + aa[None, :] * (x_c - f_q_i)
        return x_h
    x_h = jax.vmap(one)(f_q, f_d, m, a)
    x = x_h.reshape(x_h.shape[0], -1) @ w_cls.T + b_cls[None, :]
    return x, x_h


if __name__ == "__main__":
    # B problem instances; each: f_q/f_d channels C, problem size n=N, K classes.
    B, C, N, K = 4, 8, 128, 16

    key = jax.random.PRNGKey(0)
    k_fq, k_fd, k_m, k_a, k_w, k_b = jax.random.split(key, 6)

    # Constructor inputs f_q, f_d (both (C, N) per instance, as implied by the lerp).
    f_q = jax.random.uniform(k_fq, (B, C, N), dtype=jnp.float32)
    f_d = jax.random.uniform(k_fd, (B, C, N), dtype=jnp.float32)

    # Parameters, matching torch.rand init (uniform [0, 1)).
    m = jax.random.uniform(k_m, (B, N, N), dtype=jnp.float32)
    a = jax.random.uniform(k_a, (B, N), dtype=jnp.float32)

    # model.classifier modeled as Linear(C*N -> K) with torch layout (K, C*N),
    # shared across instances.
    w_cls = 0.02 * jax.random.normal(k_w, (K, C * N), dtype=jnp.float32)
    b_cls = 0.01 * jax.random.normal(k_b, (K,), dtype=jnp.float32)

    x, x_h = continuous_problem_forward(f_q, f_d, m, a, w_cls, b_cls)
    jax.block_until_ready((x, x_h))

    x_ref, xh_ref = _reference(f_q, f_d, m, a, w_cls, b_cls)
    assert x.shape == (B, K) and x_h.shape == (B, C, N)
    # Exact softmax normalization now; only normal matmul rounding remains.
    assert jnp.allclose(x_h, xh_ref, atol=1e-4, rtol=1e-4)
    assert jnp.allclose(x, x_ref, atol=1e-4, rtol=1e-4)

    print("KERNEL_OK")
</pallas_src>

<mosaic_0001>
module attributes {stable_mosaic.version = 11 : i64} {
  func.func @continuous_problem_kernel(%arg0: i32, %arg1: memref<1x8x128xf32, #tpu.memory_space<vmem>>, %arg2: memref<1x8x128xf32, #tpu.memory_space<vmem>>, %arg3: memref<1x128x128xf32, #tpu.memory_space<vmem>>, %arg4: memref<1x1x128xf32, #tpu.memory_space<vmem>>, %arg5: memref<1x8x128xf32, #tpu.memory_space<vmem>>) attributes {dimension_semantics = [#tpu.dimension_semantics<parallel>], iteration_bounds = array<i64: 4>, scalar_prefetch = 0 : i64, scratch_operands = 0 : i64, tpu.core_type = #tpu.core_type<tc>, window_params = [{transform_indices = @transform_0, window_bounds = array<i64: 1, 8, 128>}, {transform_indices = @transform_1, window_bounds = array<i64: 1, 8, 128>}, {transform_indices = @transform_2, window_bounds = array<i64: 1, 128, 128>}, {transform_indices = @transform_3, window_bounds = array<i64: 1, 1, 128>}, {transform_indices = @transform_4, window_bounds = array<i64: 1, 8, 128>}]} {
    %c0 = arith.constant 0 : index
    %c0_0 = arith.constant 0 : index
    %c0_1 = arith.constant 0 : index
    %0 = vector.load %arg3[%c0, %c0_0, %c0_1] : memref<1x128x128xf32, #tpu.memory_space<vmem>>, vector<1x128x128xf32>
    %1 = vector.shape_cast %0 : vector<1x128x128xf32> to vector<128x128xf32>
    %cst = arith.constant dense<0xFF800000> : vector<128xf32>
    %2 = vector.multi_reduction <maximumf>, %1, %cst [1] : vector<128x128xf32> to vector<128xf32>
    %3 = vector.shape_cast %2 : vector<128xf32> to vector<128x1xf32>
    %4 = vector.broadcast %3 : vector<128x1xf32> to vector<128x128xf32>
    %5 = arith.subf %1, %4 : vector<128x128xf32>
    %6 = math.exp %5 : vector<128x128xf32>
    %cst_2 = arith.constant 1.000000e+00 : f32
    %7 = vector.broadcast %cst_2 : f32 to vector<128x1xf32>
    %cst_3 = arith.constant dense<0.000000e+00> : vector<128x1xf32>
    %8 = tpu.matmul %6, %7, %cst_3 {dimension_numbers = #tpu.dot_dimension_numbers<[1], [0], [0], [1], [0, 0, 1, 1], [], []>} : vector<128x128xf32>, vector<128x1xf32>, vector<128x1xf32> -> vector<128x1xf32>
    %cst_4 = arith.constant 1.000000e+00 : f32
    %9 = vector.broadcast %cst_4 : f32 to vector<128x1xf32>
    %10 = arith.divf %9, %8 : vector<128x1xf32>
    %11 = vector.broadcast %10 : vector<128x1xf32> to vector<128x128xf32>
    %12 = arith.mulf %6, %11 : vector<128x128xf32>
    %c0_5 = arith.constant 0 : index
    %c0_6 = arith.constant 0 : index
    %c0_7 = arith.constant 0 : index
    %13 = vector.load %arg2[%c0_5, %c0_6, %c0_7] : memref<1x8x128xf32, #tpu.memory_space<vmem>>, vector<1x8x128xf32>
    %14 = vector.shape_cast %13 : vector<1x8x128xf32> to vector<8x128xf32>
    %cst_8 = arith.constant dense<0.000000e+00> : vector<8x128xf32>
    %15 = tpu.matmul %14, %12, %cst_8 {dimension_numbers = #tpu.dot_dimension_numbers<[1], [0], [0], [1], [0, 0, 1, 1], [], []>} : vector<8x128xf32>, vector<128x128xf32>, vector<8x128xf32> -> vector<8x128xf32>
    %c0_9 = arith.constant 0 : index
    %c0_10 = arith.constant 0 : index
    %c0_11 = arith.constant 0 : index
    %16 = vector.load %arg4[%c0_9, %c0_10, %c0_11] : memref<1x1x128xf32, #tpu.memory_space<vmem>>, vector<1x1x128xf32>
    %17 = vector.shape_cast %16 : vector<1x1x128xf32> to vector<1x128xf32>
    %cst_12 = arith.constant dense<0xFF800000> : vector<1xf32>
    %18 = vector.multi_reduction <maximumf>, %17, %cst_12 [1] : vector<1x128xf32> to vector<1xf32>
    %19 = vector.shape_cast %18 : vector<1xf32> to vector<1x1xf32>
    %20 = vector.broadcast %19 : vector<1x1xf32> to vector<1x128xf32>
    %21 = arith.subf %17, %20 : vector<1x128xf32>
    %22 = math.exp %21 : vector<1x128xf32>
    %cst_13 = arith.constant dense<0.000000e+00> : vector<1xf32>
    %23 = vector.multi_reduction <add>, %22, %cst_13 [1] : vector<1x128xf32> to vector<1xf32>
    %24 = vector.shape_cast %23 : vector<1xf32> to vector<1x1xf32>
    %25 = vector.broadcast %24 : vector<1x1xf32> to vector<1x128xf32>
    %26 = arith.divf %22, %25 : vector<1x128xf32>
    %c0_14 = arith.constant 0 : index
    %c0_15 = arith.constant 0 : index
    %c0_16 = arith.constant 0 : index
    %27 = vector.load %arg1[%c0_14, %c0_15, %c0_16] : memref<1x8x128xf32, #tpu.memory_space<vmem>>, vector<1x8x128xf32>
    %28 = vector.shape_cast %27 : vector<1x8x128xf32> to vector<8x128xf32>
    %29 = arith.subf %15, %28 : vector<8x128xf32>
    %30 = vector.broadcast %26 : vector<1x128xf32> to vector<8x128xf32>
    %31 = arith.mulf %30, %29 : vector<8x128xf32>
    %32 = arith.addf %28, %31 : vector<8x128xf32>
    %c0_17 = arith.constant 0 : index
    %c0_18 = arith.constant 0 : index
    %c0_19 = arith.constant 0 : index
    %33 = vector.load %arg5[%c0_17, %c0_18, %c0_19] : memref<1x8x128xf32, #tpu.memory_space<vmem>>, vector<1x8x128xf32>
    %34 = vector.shape_cast %33 : vector<1x8x128xf32> to vector<8x128xf32>
    %35 = vector.shape_cast %32 : vector<8x128xf32> to vector<1x8x128xf32>
    tpu.vector_store %arg5[%c0_17, %c0_18, %c0_19], %35 {strides = array<i32>} : memref<1x8x128xf32, #tpu.memory_space<vmem>>, vector<1x8x128xf32>,
    return
  }
  func.func @transform_0(%arg0: i32) -> (i32, i32, i32) {
    %c0_i32 = arith.constant 0 : i32
    %c0_i32_0 = arith.constant 0 : i32
    %c0_i32_1 = arith.constant 0 : i32
    return %arg0, %c0_i32, %c0_i32_0 : i32, i32, i32
  }
  func.func @transform_1(%arg0: i32) -> (i32, i32, i32) {
    %c0_i32 = arith.constant 0 : i32
    %c0_i32_0 = arith.constant 0 : i32
    %c0_i32_1 = arith.constant 0 : i32
    return %arg0, %c0_i32, %c0_i32_0 : i32, i32, i32
  }
  func.func @transform_2(%arg0: i32) -> (i32, i32, i32) {
    %c0_i32 = arith.constant 0 : i32
    %c0_i32_0 = arith.constant 0 : i32
    %c0_i32_1 = arith.constant 0 : i32
    return %arg0, %c0_i32, %c0_i32_0 : i32, i32, i32
  }
  func.func @transform_3(%arg0: i32) -> (i32, i32, i32) {
    %c0_i32 = arith.constant 0 : i32
    %c0_i32_0 = arith.constant 0 : i32
    %c0_i32_1 = arith.constant 0 : i32
    return %arg0, %c0_i32, %c0_i32_0 : i32, i32, i32
  }
  func.func @transform_4(%arg0: i32) -> (i32, i32, i32) {
    %c0_i32 = arith.constant 0 : i32
    %c0_i32_0 = arith.constant 0 : i32
    %c0_i32_1 = arith.constant 0 : i32
    return %arg0, %c0_i32, %c0_i32_0 : i32, i32, i32
  }
}

</mosaic_0001>

<llo_original>
// kernel: continuous_problem_forward.1
$region0: #{continuous_problem_forward.1}
  #allocation0 [shape = 'u32[]', space=smem, size = 0x4, offset = 0x4, fixed_abs, tag = 'smem constant byte address 0x4 - core index']
  #allocation1 [shape = 'u32[144,128]{1,0:T(1,128)}', space=vmem, size = 0x12000, scoped, tag = 'internal scratch']
  %s0 = inlined_call_operand.hbm [shape: f32[4,8,128], index: 0, kind: input, shape index: {}]
  %s1 = inlined_call_operand.hbm [shape: f32[4,8,128], index: 1, kind: input, shape index: {}]
  %s2 = inlined_call_operand.hbm [shape: f32[4,128,128], index: 2, kind: input, shape index: {}]
  %s3 = inlined_call_operand.vmem [shape: f32[4,1,128], index: 3, kind: input, shape index: {}]
  %s4 = inlined_call_operand.vmem [shape: f32[4,8,128], index: 4, kind: output, shape index: {}]
  %s5 = sld [smem:[#allocation0]]
  $region61: #{continuous_problem_forward.1} parent=0
    _
  %s7 = ssub.s32 1, %s5
  %s8 = scalar_select 0, %s7, %s5
  $region1: #{continuous_problem_forward.1} parent=0
    #allocation2 [shape = 'u8[8192]{0}', space=vmem, size = 0x2000, scoped, tag = 'input window, operand 0']
    #allocation3 [shape = 's32[2]{0}', space=sflag, size = 0x8, scoped, tag = 'scoped memory for continuous_problem_forward.1']
    #allocation4 [shape = 'u8[8192]{0}', space=vmem, size = 0x2000, scoped, tag = 'input window, operand 1']
    #allocation5 [shape = 's32[2]{0}', space=sflag, size = 0x8, scoped, tag = 'scoped memory for continuous_problem_forward.1']
    #allocation6 [shape = 'u8[131072]{0}', space=vmem, size = 0x20000, scoped, tag = 'input window, operand 2']
    %9 = vsyncpa [#allocation3], 0
    %s10 = scalar_lea.sflag [#allocation3], 1
    %11 = vsyncpa %s10, 0
    %12 = vsyncpa [#allocation5], 0
    %s13 = scalar_lea.sflag [#allocation5], 1
    %14 = vsyncpa %s13, 0
    loop: start=0, step=1, limit=6
    $region2: #{continuous_problem_forward.1} parent=1 // loop_pre_header
      _
    $region3: #{continuous_problem_forward.1} parent=1 // loop_header
      %s16 = sphi 0, %s20
      %p17 = scmp.ge.s32.totalorder %s16, 6
      %s26 = sphi 0, %s28
      %s29 = sphi 0, %s26
      %s30 = sphi 0, %s29
      %s46 = sphi 0, %s30
      %s52 = sphi 0, %s54
      %s55 = sphi 0, %s52
      %s56 = sphi 0, %s55
      %s72 = sphi 0, %s56
      %s78 = sphi 0, %s80
      %s81 = sphi 0, %s78
      %s82 = sphi 0, %s81
      %s98 = sphi 0, %s82
      %s104 = sphi 0, %s106
      %s107 = sphi 0, %s104
      %s108 = sphi 0, %s107
      %s124 = sphi 0, %s108
      %s130 = sphi 0, %s132
      %s133 = sphi 0, %s130
      %s134 = sphi 0, %s133
      %s150 = sphi 0, %s134
    $region4: #{continuous_problem_forward.1} parent=1 // loop_header_branch
      %19 = sbr.rel (%p17) target = $region8
    $region5: #{continuous_problem_forward.1} parent=1 // loop_body
      %s21 = ssub.s32 %s16, 1
      %s22 = ssub.s32 %s16, 2
      %s23 = sadd.s32 %s16, 1
      %s24 = ssub.s32 %s16, %s23
      %p25 = scmp.eq.s32.totalorder %s24, 0
      %s27 = sadd.s32 %s26, 1
      %s28 = scalar_select %p25, %s26, %s27
      %p31 = pneg %p25
      %p32 = scmp.eq.s32.totalorder %s16, 3
      %p33 = por %p31, %p32
      %p34 = scmp.ne.s32.totalorder %s26, %s29
      %p35 = scmp.eq.s32.totalorder %s16, 0
      %p36 = por %p34, %p35
      %p37 = scmp.ne.s32.totalorder %s26, %s29
      %p38 = scmp.eq.s32.totalorder %s21, 3
      %p39 = por %p37, %p38
      %p40 = scmp.ne.s32.totalorder %s29, %s30
      %p41 = scmp.eq.s32.totalorder %s21, 0
      %p42 = por %p40, %p41
      %p43 = scmp.ne.s32.totalorder %s29, %s30
      %p44 = scmp.eq.s32.totalorder %s22, 3
      %p45 = por %p43, %p44
      %p47 = scmp.ne.s32.totalorder %s30, %s46
      %p48 = scmp.eq.s32.totalorder %s22, 0
      %p49 = por %p47, %p48
      %s50 = ssub.s32 %s16, %s23
      %p51 = scmp.eq.s32.totalorder %s50, 0
      %s53 = sadd.s32 %s52, 1
      %s54 = scalar_select %p51, %s52, %s53
      %p57 = pneg %p51
      %p58 = scmp.eq.s32.totalorder %s16, 3
      %p59 = por %p57, %p58
      %p60 = scmp.ne.s32.totalorder %s52, %s55
      %p61 = scmp.eq.s32.totalorder %s16, 0
      %p62 = por %p60, %p61
      %p63 = scmp.ne.s32.totalorder %s52, %s55
      %p64 = scmp.eq.s32.totalorder %s21, 3
      %p65 = por %p63, %p64
      %p66 = scmp.ne.s32.totalorder %s55, %s56
      %p67 = scmp.eq.s32.totalorder %s21, 0
      %p68 = por %p66, %p67
      %p69 = scmp.ne.s32.totalorder %s55, %s56
      %p70 = scmp.eq.s32.totalorder %s22, 3
      %p71 = por %p69, %p70
      %p73 = scmp.ne.s32.totalorder %s56, %s72
      %p74 = scmp.eq.s32.totalorder %s22, 0
      %p75 = por %p73, %p74
      %s76 = ssub.s32 %s16, %s23
      %p77 = scmp.eq.s32.totalorder %s76, 0
      %s79 = sadd.s32 %s78, 1
      %s80 = scalar_select %p77, %s78, %s79
      %p83 = pneg %p77
      %p84 = scmp.eq.s32.totalorder %s16, 3
      %p85 = por %p83, %p84
      %p86 = scmp.ne.s32.totalorder %s78, %s81
      %p87 = scmp.eq.s32.totalorder %s16, 0
      %p88 = por %p86, %p87
      %p89 = scmp.ne.s32.totalorder %s78, %s81
      %p90 = scmp.eq.s32.totalorder %s21, 3
      %p91 = por %p89, %p90
      %p92 = scmp.ne.s32.totalorder %s81, %s82
      %p93 = scmp.eq.s32.totalorder %s21, 0
      %p94 = por %p92, %p93
      %p95 = scmp.ne.s32.totalorder %s81, %s82
      %p96 = scmp.eq.s32.totalorder %s22, 3
      %p97 = por %p95, %p96
      %p99 = scmp.ne.s32.totalorder %s82, %s98
      %p100 = scmp.eq.s32.totalorder %s22, 0
      %p101 = por %p99, %p100
      %s102 = ssub.s32 %s16, %s23
      %p103 = scmp.eq.s32.totalorder %s102, 0
      %s105 = sadd.s32 %s104, 1
      %s106 = scalar_select %p103, %s104, %s105
      %p109 = pneg %p103
      %p110 = scmp.eq.s32.totalorder %s16, 3
      %p111 = por %p109, %p110
      %p112 = scmp.ne.s32.totalorder %s104, %s107
      %p113 = scmp.eq.s32.totalorder %s16, 0
      %p114 = por %p112, %p113
      %p115 = scmp.ne.s32.totalorder %s104, %s107
      %p116 = scmp.eq.s32.totalorder %s21, 3
      %p117 = por %p115, %p116
      %p118 = scmp.ne.s32.totalorder %s107, %s108
      %p119 = scmp.eq.s32.totalorder %s21, 0
      %p120 = por %p118, %p119
      %p121 = scmp.ne.s32.totalorder %s107, %s108
      %p122 = scmp.eq.s32.totalorder %s22, 3
      %p123 = por %p121, %p122
      %p125 = scmp.ne.s32.totalorder %s108, %s124
      %p126 = scmp.eq.s32.totalorder %s22, 0
      %p127 = por %p125, %p126
      %s128 = ssub.s32 %s16, %s23
      %p129 = scmp.eq.s32.totalorder %s128, 0
      %s131 = sadd.s32 %s130, 1
      %s132 = scalar_select %p129, %s130, %s131
      %p135 = pneg %p129
      %p136 = scmp.eq.s32.totalorder %s16, 3
      %p137 = por %p135, %p136
      %p138 = scmp.ne.s32.totalorder %s130, %s133
      %p139 = scmp.eq.s32.totalorder %s16, 0
      %p140 = por %p138, %p139
      %p141 = scmp.ne.s32.totalorder %s130, %s133
      %p142 = scmp.eq.s32.totalorder %s21, 3
      %p143 = por %p141, %p142
      %p144 = scmp.ne.s32.totalorder %s133, %s134
      %p145 = scmp.eq.s32.totalorder %s21, 0
      %p146 = por %p144, %p145
      %p147 = scmp.ne.s32.totalorder %s133, %s134
      %p148 = scmp.eq.s32.totalorder %s22, 3
      %p149 = por %p147, %p148
      %p151 = scmp.ne.s32.totalorder %s134, %s150
      %p152 = scmp.eq.s32.totalorder %s22, 0
      %p153 = por %p151, %p152
      %p154 = scmp.le.s32.totalorder 1, %s16
      %p155 = scmp.lt.s32.totalorder %s16, 5
      %p156 = pnand %p154, %p155
      %p157 = pneg %p156
      // Predicated region
      $region9: #{continuous_problem_forward.1} parent=5 // pred_check
        _
      $region10: #{continuous_problem_forward.1} parent=5 // pred_check_branch
        %159 = sbr.rel (%p156) target = $region12
      $region11: #{continuous_problem_forward.1} parent=5 // pred_region
        %s160 = ssub.s32 %s16, 1
      $region12: #{continuous_problem_forward.1} parent=5 // pred_fallthru
        _
      %p161 = scmp.lt.s32.totalorder %s16, 4
      // Predicated region
      $region13: #{continuous_problem_forward.1} parent=5 // pred_check
        %p162 = pneg %p161
      $region14: #{continuous_problem_forward.1} parent=5 // pred_check_branch
        %164 = sbr.rel (%p162) target = $region16
      $region15: #{continuous_problem_forward.1} parent=5 // pred_region
        // Predicated region
        $region17: #{continuous_problem_forward.1} parent=15 // pred_check
          %p165 = pneg %p36
        $region18: #{continuous_problem_forward.1} parent=15 // pred_check_branch
          %167 = sbr.rel (%p165) target = $region20
        $region19: #{continuous_problem_forward.1} parent=15 // pred_region
          %s168 = sand.u32 %s26, 1
          %s169 = scalar_lea.sflag [#allocation3], %s168
          %s170 = sand.u32 %s26, 1
          %s171 = smul.addr %s170, 8
          %s172 = scalar_lea.vmem [#allocation2], %s171
          %s174 = ssub.s32 128, 128
          %175 = vsyncadd %s169, %s174
          %s176 = smul.addr %s16, 128
          %s177 = scalar_lea.hbm %s0, %s176
          %s179 = sshll.u32 %s172, 4
          %s180 = int_to_ptr.vmem [resolvable:$true] %s179
          %182 = dma.hbm_to_vmem [thread:$0]  %s177, 128, %s180, %s169
        $region20: #{continuous_problem_forward.1} parent=15 // pred_fallthru
          _
        // Predicated region
        $region21: #{continuous_problem_forward.1} parent=15 // pred_check
          %p183 = pneg %p62
        $region22: #{continuous_problem_forward.1} parent=15 // pred_check_branch
          %185 = sbr.rel (%p183) target = $region24
        $region23: #{continuous_problem_forward.1} parent=15 // pred_region
          %s186 = sand.u32 %s16, 1
          %s187 = scalar_lea.sflag [#allocation5], %s186
          %s188 = sand.u32 %s52, 1
          %s189 = smul.addr %s188, 8
          %s190 = scalar_lea.vmem [#allocation4], %s189
          %s192 = ssub.s32 128, 128
          %193 = vsyncadd %s187, %s192
          %s194 = smul.addr %s16, 128
          %s195 = scalar_lea.hbm %s1, %s194
          %s197 = sshll.u32 %s190, 4
          %s198 = int_to_ptr.vmem [resolvable:$true] %s197
          %200 = dma.hbm_to_vmem [thread:$0]  %s195, 128, %s198, %s187
        $region24: #{continuous_problem_forward.1} parent=15 // pred_fallthru
          _
        // Predicated region
        $region25: #{continuous_problem_forward.1} parent=15 // pred_check
          %p201 = pneg %p88
        $region26: #{continuous_problem_forward.1} parent=15 // pred_check_branch
          %203 = sbr.rel (%p201) target = $region28
        $region27: #{continuous_problem_forward.1} parent=15 // pred_region
          %s204 = sand.u32 %s16, 1
          %s205 = scalar_lea.sflag [#allocation5], %s204
          %s206 = sand.u32 %s78, 1
          %s207 = smul.addr %s206, 128
          %s208 = scalar_lea.vmem [#allocation6], %s207
          %s210 = ssub.s32 2048, 2048
          %211 = vsyncadd %s205, %s210
          %s212 = smul.addr %s16, 16
          %s213 = smul.addr %s212, 128
          %s214 = scalar_lea.hbm %s2, %s213
          %s215 = sshll.u32 %s208, 4
          %s216 = int_to_ptr.vmem [resolvable:$true] %s215
          %221 = dma.hbm_to_vmem [thread:$0]  %s214, 2048, %s216, %s205, 128, 128, 8
        $region28: #{continuous_problem_forward.1} parent=15 // pred_fallthru
          _
        // Predicated region
        $region29: #{continuous_problem_forward.1} parent=15 // pred_check
          %p222 = pneg %p114
        $region30: #{continuous_problem_forward.1} parent=15 // pred_check_branch
          %224 = sbr.rel (%p222) target = $region32
        $region31: #{continuous_problem_forward.1} parent=15 // pred_region
          %p225 = scmp.lt.s32.totalorder %s16, 3
          %s226 = scalar_select %p225, %s16, 3
          %s227 = scalar_lea.vmem %s3, %s226
        $region32: #{continuous_problem_forward.1} parent=15 // pred_fallthru
          _
      $region16: #{continuous_problem_forward.1} parent=5 // pred_fallthru
        _
      %p228 = scmp.le.s32.totalorder 1, %s16
      %p229 = scmp.lt.s32.totalorder %s16, 5
      %p230 = pnand %p228, %p229
      %p231 = pneg %p230
      // Predicated region
      $region33: #{continuous_problem_forward.1} parent=5 // pred_check
        _
      $region34: #{continuous_problem_forward.1} parent=5 // pred_check_branch
        %233 = sbr.rel (%p230) target = $region36
      $region35: #{continuous_problem_forward.1} parent=5 // pred_region
        %s234 = ssub.s32 %s16, 1
        %s235 = sand.u32 %s29, 1
        %s236 = scalar_lea.sflag [#allocation3], %s235
        %s237 = sand.u32 %s29, 1
        %s238 = smul.addr %s237, 8
        %s239 = scalar_lea.vmem [#allocation2], %s238
        // Predicated region
        $region37: #{continuous_problem_forward.1} parent=35 // pred_check
          %p240 = pneg %p42
        $region38: #{continuous_problem_forward.1} parent=35 // pred_check_branch
          %242 = sbr.rel (%p240) target = $region40
        $region39: #{continuous_problem_forward.1} parent=35 // pred_region
          %243 = dma.done %s236, 128
        $region40: #{continuous_problem_forward.1} parent=35 // pred_fallthru
          _
        %s244 = sand.u32 %s21, 1
        %s245 = scalar_lea.sflag [#allocation5], %s244
        %s246 = sand.u32 %s55, 1
        %s247 = smul.addr %s246, 8
        %s248 = scalar_lea.vmem [#allocation4], %s247
        // Predicated region
        $region41: #{continuous_problem_forward.1} parent=35 // pred_check
          %p249 = pneg %p68
        $region42: #{continuous_problem_forward.1} parent=35 // pred_check_branch
          %251 = sbr.rel (%p249) target = $region44
        $region43: #{continuous_problem_forward.1} parent=35 // pred_region
          %252 = dma.done %s245, 128
        $region44: #{continuous_problem_forward.1} parent=35 // pred_fallthru
          _
        %s253 = sand.u32 %s21, 1
        %s254 = scalar_lea.sflag [#allocation5], %s253
        %s255 = sand.u32 %s81, 1
        %s256 = smul.addr %s255, 128
        %s257 = scalar_lea.vmem [#allocation6], %s256
        // Predicated region
        $region45: #{continuous_problem_forward.1} parent=35 // pred_check
          %p258 = pneg %p94
        $region46: #{continuous_problem_forward.1} parent=35 // pred_check_branch
          %260 = sbr.rel (%p258) target = $region48
        $region47: #{continuous_problem_forward.1} parent=35 // pred_region
          %261 = dma.done %s254, 2048
        $region48: #{continuous_problem_forward.1} parent=35 // pred_fallthru
          _
        %s262 = sand.u32 %s29, 1
        %s263 = scalar_lea.sflag [#allocation3], %s262
        %s264 = sand.u32 %s29, 1
        %s265 = smul.addr %s264, 8
        %s266 = scalar_lea.vmem [#allocation2], %s265
        %p267 = pneg %p42
        %p268 = pneg %p39
        %s269 = sand.u32 %s21, 1
        %s270 = scalar_lea.sflag [#allocation5], %s269
        %s271 = sand.u32 %s55, 1
        %s272 = smul.addr %s271, 8
        %s273 = scalar_lea.vmem [#allocation4], %s272
        %p274 = pneg %p68
        %p275 = pneg %p65
        %s276 = sand.u32 %s21, 1
        %s277 = scalar_lea.sflag [#allocation5], %s276
        %s278 = sand.u32 %s81, 1
        %s279 = smul.addr %s278, 128
        %s280 = scalar_lea.vmem [#allocation6], %s279
        %p281 = pneg %p94
        %p282 = pneg %p91
        %p283 = scmp.lt.s32.totalorder %s21, 3
        %s284 = scalar_select %p283, %s21, 3
        %s285 = scalar_lea.vmem %s3, %s284
        %p286 = pneg %p120
        %p287 = pneg %p117
        %p288 = pneg %p146
        %p289 = pneg %p143
        %p290 = scmp.lt.s32.totalorder %s21, 3
        %s291 = scalar_select %p290, %s21, 3
        %s292 = smul.addr %s291, 8
        %s293 = scalar_lea.vmem %s4, %s292
        %p294 = scmp.lt.s32.totalorder %s21, 3
        %s295 = scalar_select %p294, %s21, 3
        %s296 = scalar_lea.vmem %s3, %s295
        %p297 = scmp.lt.s32.totalorder %s21, 3
        %s298 = scalar_select %p297, %s21, 3
        %s299 = smul.addr %s298, 8
        %s300 = scalar_lea.vmem %s4, %s299
        %v301 = vld [vmem:[%s257] sm:$0xff]
        %v302 = vld [vmem:[%s257 + $0x8] sm:$0xff]
        %v303 = vld [vmem:[%s257 + $0x10] sm:$0xff]
        %v304 = vld [vmem:[%s257 + $0x18] sm:$0xff]
        %v305 = vld [vmem:[%s257 + $0x20] sm:$0xff]
        %v306 = vld [vmem:[%s257 + $0x28] sm:$0xff]
        %v307 = vld [vmem:[%s257 + $0x30] sm:$0xff]
        %v308 = vld [vmem:[%s257 + $0x38] sm:$0xff]
        %v309 = vld [vmem:[%s257 + $0x40] sm:$0xff]
        %v310 = vld [vmem:[%s257 + $0x48] sm:$0xff]
        %v311 = vld [vmem:[%s257 + $0x50] sm:$0xff]
        %v312 = vld [vmem:[%s257 + $0x58] sm:$0xff]
        %v313 = vld [vmem:[%s257 + $0x60] sm:$0xff]
        %v314 = vld [vmem:[%s257 + $0x68] sm:$0xff]
        %v315 = vld [vmem:[%s257 + $0x70] sm:$0xff]
        %v316 = vld [vmem:[%s257 + $0x78] sm:$0xff]
        %317 = vmax.xlane.f32.xlu0 %v301
        %v318 = vpop.xlane.xlu0 %317
        %319 = vmax.xlane.f32.xlu0 %v302
        %v320 = vpop.xlane.xlu0 %319
        %321 = vmax.xlane.f32.xlu0 %v303
        %v322 = vpop.xlane.xlu0 %321
        %323 = vmax.xlane.f32.xlu0 %v304
        %v324 = vpop.xlane.xlu0 %323
        %325 = vmax.xlane.f32.xlu0 %v305
        %v326 = vpop.xlane.xlu0 %325
        %327 = vmax.xlane.f32.xlu0 %v306
        %v328 = vpop.xlane.xlu0 %327
        %329 = vmax.xlane.f32.xlu0 %v307
        %v330 = vpop.xlane.xlu0 %329
        %331 = vmax.xlane.f32.xlu0 %v308
        %v332 = vpop.xlane.xlu0 %331
        %333 = vmax.xlane.f32.xlu0 %v309
        %v334 = vpop.xlane.xlu0 %333
        %335 = vmax.xlane.f32.xlu0 %v310
        %v336 = vpop.xlane.xlu0 %335
        %337 = vmax.xlane.f32.xlu0 %v311
        %v338 = vpop.xlane.xlu0 %337
        %339 = vmax.xlane.f32.xlu0 %v312
        %v340 = vpop.xlane.xlu0 %339
        %341 = vmax.xlane.f32.xlu0 %v313
        %v342 = vpop.xlane.xlu0 %341
        %343 = vmax.xlane.f32.xlu0 %v314
        %v344 = vpop.xlane.xlu0 %343
        %345 = vmax.xlane.f32.xlu0 %v315
        %v346 = vpop.xlane.xlu0 %345
        %347 = vmax.xlane.f32.xlu0 %v316
        %v348 = vpop.xlane.xlu0 %347
        %v349 = vsub.f32 %v301, %v318
        %v350 = vsub.f32 %v302, %v320
        %v351 = vsub.f32 %v303, %v322
        %v352 = vsub.f32 %v304, %v324
        %v353 = vsub.f32 %v305, %v326
        %v354 = vsub.f32 %v306, %v328
        %v355 = vsub.f32 %v307, %v330
        %v356 = vsub.f32 %v308, %v332
        %v357 = vsub.f32 %v309, %v334
        %v358 = vsub.f32 %v310, %v336
        %v359 = vsub.f32 %v311, %v338
        %v360 = vsub.f32 %v312, %v340
        %v361 = vsub.f32 %v313, %v342
        %v362 = vsub.f32 %v314, %v344
        %v363 = vsub.f32 %v315, %v346
        %v364 = vsub.f32 %v316, %v348
        %v365 = vmul.f32 %v349, 1.442695
        %v366 = vpow.pop %v365
        %v367 = vmul.f32 %v350, 1.442695
        %v368 = vpow.pop %v367
        %v369 = vmul.f32 %v351, 1.442695
        %v370 = vpow.pop %v369
        %v371 = vmul.f32 %v352, 1.442695
        %v372 = vpow.pop %v371
        %v373 = vmul.f32 %v353, 1.442695
        %v374 = vpow.pop %v373
        %v375 = vmul.f32 %v354, 1.442695
        %v376 = vpow.pop %v375
        %v377 = vmul.f32 %v355, 1.442695
        %v378 = vpow.pop %v377
        %v379 = vmul.f32 %v356, 1.442695
        %v380 = vpow.pop %v379
        %v381 = vmul.f32 %v357, 1.442695
        %v382 = vpow.pop %v381
        %v383 = vmul.f32 %v358, 1.442695
        %v384 = vpow.pop %v383
        %v385 = vmul.f32 %v359, 1.442695
        %v386 = vpow.pop %v385
        %v387 = vmul.f32 %v360, 1.442695
        %v388 = vpow.pop %v387
        %v389 = vmul.f32 %v361, 1.442695
        %v390 = vpow.pop %v389
        %v391 = vmul.f32 %v362, 1.442695
        %v392 = vpow.pop %v391
        %v393 = vmul.f32 %v363, 1.442695
        %v394 = vpow.pop %v393
        %v395 = vmul.f32 %v364, 1.442695
        %v396 = vpow.pop %v395
        %397 = vmatprep.subr.mxu0 0.0
        %398 = vmatpush1.msra.mxu0 1.0
        %399 = vmatprep.subr.mxu0 0.0
        %400 = vmatpush1.msra.mxu0 1.0
        %401 = vmatprep.subr.mxu0 0.0
        %402 = vmatpush1.msra.mxu0 1.0
        %403 = vmatprep.subr.mxu0 0.0
        %404 = vmatpush1.msra.mxu0 1.0
        %405 = vmatprep.subr.mxu0 0.0
        %406 = vmatpush1.msra.mxu0 1.0
        %407 = vmatprep.subr.mxu0 0.0
        %408 = vmatpush1.msra.mxu0 1.0
        %409 = vmatprep.subr.mxu0 0.0
        %410 = vmatpush1.msra.mxu0 1.0
        %411 = vmatprep.subr.mxu0 0.0
        %412 = vmatpush1.msra.mxu0 1.0
        %413 = vmatprep.subr.mxu0 0.0
        %414 = vmatpush1.msra.mxu0 1.0
        %415 = vmatprep.subr.mxu0 0.0
        %416 = vmatpush1.msra.mxu0 1.0
        %417 = vmatprep.subr.mxu0 0.0
        %418 = vmatpush1.msra.mxu0 1.0
        %419 = vmatprep.subr.mxu0 0.0
        %420 = vmatpush1.msra.mxu0 1.0
        %421 = vmatprep.subr.mxu0 0.0
        %422 = vmatpush1.msra.mxu0 1.0
        %423 = vmatprep.subr.mxu0 0.0
        %424 = vmatpush1.msra.mxu0 1.0
        %425 = vmatprep.subr.mxu0 0.0
        %426 = vmatpush1.msra.mxu0 1.0
        %427 = vmatprep.subr.mxu0 0.0
        %428 = vmatpush1.msra.mxu0 1.0
        %429 = vmatprep.subr.mxu0 0.0
        %430 = vmatpush2.msra.mxu0 0.0
        %431 = vmatprep.subr.mxu0 0.0
        %432 = vmatpush2.msra.mxu0 0.0
        %433 = vmatprep.subr.mxu0 0.0
        %434 = vmatpush2.msra.mxu0 0.0
        %435 = vmatprep.subr.mxu0 0.0
        %436 = vmatpush2.msra.mxu0 0.0
        %437 = vmatprep.subr.mxu0 0.0
        %438 = vmatpush2.msra.mxu0 0.0
        %439 = vmatprep.subr.mxu0 0.0
        %440 = vmatpush2.msra.mxu0 0.0
        %441 = vmatprep.subr.mxu0 0.0
        %442 = vmatpush2.msra.mxu0 0.0
        %443 = vmatprep.subr.mxu0 0.0
        %444 = vmatpush2.msra.mxu0 0.0
        %445 = vmatprep.subr.mxu0 0.0
        %446 = vmatpush2.msra.mxu0 0.0
        %447 = vmatprep.subr.mxu0 0.0
        %448 = vmatpush2.msra.mxu0 0.0
        %449 = vmatprep.subr.mxu0 0.0
        %450 = vmatpush2.msra.mxu0 0.0
        %451 = vmatprep.subr.mxu0 0.0
        %452 = vmatpush2.msra.mxu0 0.0
        %453 = vmatprep.subr.mxu0 0.0
        %454 = vmatpush2.msra.mxu0 0.0
        %455 = vmatprep.subr.mxu0 0.0
        %456 = vmatpush2.msra.mxu0 0.0
        %457 = vmatprep.subr.mxu0 0.0
        %458 = vmatpush2.msra.mxu0 0.0
        %459 = vmatprep.subr.mxu0 0.0
        %460 = vmatpush2.msra.mxu0 0.0
        %461 = vmatprep.mubr.f32.mxu0 0.0
        %462 = vmatmul.mubr.f32.gmra.mxu0 %v366
        %v463 = vpop.f32.mrf.mxu0
        %v464 = vadd.f32 0.0, %v463
        %v465 = vpop.f32.mrf.mxu0
        %466 = vmatprep.mubr.f32.mxu0 0.0
        %467 = vmatmul.mubr.f32.gmra.mxu0 %v368
        %v468 = vpop.f32.mrf.mxu0
        %v469 = vadd.f32 0.0, %v468
        %v470 = vpop.f32.mrf.mxu0
        %471 = vmatprep.mubr.f32.mxu0 0.0
        %472 = vmatmul.mubr.f32.gmra.mxu0 %v370
        %v473 = vpop.f32.mrf.mxu0
        %v474 = vadd.f32 0.0, %v473
        %v475 = vpop.f32.mrf.mxu0
        %476 = vmatprep.mubr.f32.mxu0 0.0
        %477 = vmatmul.mubr.f32.gmra.mxu0 %v372
        %v478 = vpop.f32.mrf.mxu0
        %v479 = vadd.f32 0.0, %v478
        %v480 = vpop.f32.mrf.mxu0
        %481 = vmatprep.mubr.f32.mxu0 0.0
        %482 = vmatmul.mubr.f32.gmra.mxu0 %v374
        %v483 = vpop.f32.mrf.mxu0
        %v484 = vadd.f32 0.0, %v483
        %v485 = vpop.f32.mrf.mxu0
        %486 = vmatprep.mubr.f32.mxu0 0.0
        %487 = vmatmul.mubr.f32.gmra.mxu0 %v376
        %v488 = vpop.f32.mrf.mxu0
        %v489 = vadd.f32 0.0, %v488
        %v490 = vpop.f32.mrf.mxu0
        %491 = vmatprep.mubr.f32.mxu0 0.0
        %492 = vmatmul.mubr.f32.gmra.mxu0 %v378
        %v493 = vpop.f32.mrf.mxu0
        %v494 = vadd.f32 0.0, %v493
        %v495 = vpop.f32.mrf.mxu0
        %496 = vmatprep.mubr.f32.mxu0 0.0
        %497 = vmatmul.mubr.f32.gmra.mxu0 %v380
        %v498 = vpop.f32.mrf.mxu0
        %v499 = vadd.f32 0.0, %v498
        %v500 = vpop.f32.mrf.mxu0
        %501 = vmatprep.mubr.f32.mxu0 0.0
        %502 = vmatmul.mubr.f32.gmra.mxu0 %v382
        %v503 = vpop.f32.mrf.mxu0
        %v504 = vadd.f32 0.0, %v503
        %v505 = vpop.f32.mrf.mxu0
        %506 = vmatprep.mubr.f32.mxu0 0.0
        %507 = vmatmul.mubr.f32.gmra.mxu0 %v384
        %v508 = vpop.f32.mrf.mxu0
        %v509 = vadd.f32 0.0, %v508
        %v510 = vpop.f32.mrf.mxu0
        %511 = vmatprep.mubr.f32.mxu0 0.0
        %512 = vmatmul.mubr.f32.gmra.mxu0 %v386
        %v513 = vpop.f32.mrf.mxu0
        %v514 = vadd.f32 0.0, %v513
        %v515 = vpop.f32.mrf.mxu0
        %516 = vmatprep.mubr.f32.mxu0 0.0
        %517 = vmatmul.mubr.f32.gmra.mxu0 %v388
        %v518 = vpop.f32.mrf.mxu0
        %v519 = vadd.f32 0.0, %v518
        %v520 = vpop.f32.mrf.mxu0
        %521 = vmatprep.mubr.f32.mxu0 0.0
        %522 = vmatmul.mubr.f32.gmra.mxu0 %v390
        %v523 = vpop.f32.mrf.mxu0
        %v524 = vadd.f32 0.0, %v523
        %v525 = vpop.f32.mrf.mxu0
        %526 = vmatprep.mubr.f32.mxu0 0.0
        %527 = vmatmul.mubr.f32.gmra.mxu0 %v392
        %v528 = vpop.f32.mrf.mxu0
        %v529 = vadd.f32 0.0, %v528
        %v530 = vpop.f32.mrf.mxu0
        %531 = vmatprep.mubr.f32.mxu0 0.0
        %532 = vmatmul.mubr.f32.gmra.mxu0 %v394
        %v533 = vpop.f32.mrf.mxu0
        %v534 = vadd.f32 0.0, %v533
        %v535 = vpop.f32.mrf.mxu0
        %536 = vmatprep.mubr.f32.mxu0 0.0
        %537 = vmatmul.mubr.f32.gmra.mxu0 %v396
        %v538 = vpop.f32.mrf.mxu0
        %v539 = vadd.f32 0.0, %v538
        %v540 = vpop.f32.mrf.mxu0
        %541 = vdwg.mxu0
        %v542 = vrcp.pop %v464
        %v543 = vmul.f32 1.0, %v542
        %v544 = vrcp.pop %v469
        %v545 = vmul.f32 1.0, %v544
        %v546 = vrcp.pop %v474
        %v547 = vmul.f32 1.0, %v546
        %v548 = vrcp.pop %v479
        %v549 = vmul.f32 1.0, %v548
        %v550 = vrcp.pop %v484
        %v551 = vmul.f32 1.0, %v550
        %v552 = vrcp.pop %v489
        %v553 = vmul.f32 1.0, %v552
        %v554 = vrcp.pop %v494
        %v555 = vmul.f32 1.0, %v554
        %v556 = vrcp.pop %v499
        %v557 = vmul.f32 1.0, %v556
        %v558 = vrcp.pop %v504
        %v559 = vmul.f32 1.0, %v558
        %v560 = vrcp.pop %v509
        %v561 = vmul.f32 1.0, %v560
        %v562 = vrcp.pop %v514
        %v563 = vmul.f32 1.0, %v562
        %v564 = vrcp.pop %v519
        %v565 = vmul.f32 1.0, %v564
        %v566 = vrcp.pop %v524
        %v567 = vmul.f32 1.0, %v566
        %v568 = vrcp.pop %v529
        %v569 = vmul.f32 1.0, %v568
        %v570 = vrcp.pop %v534
        %v571 = vmul.f32 1.0, %v570
        %v572 = vrcp.pop %v539
        %v573 = vmul.f32 1.0, %v572
        %575 = vset.pattern.permute.xlu0 0
        %576 = vperm.xlu0 %575, %v543
        %v577 = vpop.permute.xlu0 %576
        %580 = vset.pattern.permute.xlu0 0
        %581 = vperm.xlu0 %580, %v545
        %v582 = vpop.permute.xlu0 %581
        %585 = vset.pattern.permute.xlu0 0
        %586 = vperm.xlu0 %585, %v547
        %v587 = vpop.permute.xlu0 %586
        %590 = vset.pattern.permute.xlu0 0
        %591 = vperm.xlu0 %590, %v549
        %v592 = vpop.permute.xlu0 %591
        %595 = vset.pattern.permute.xlu0 0
        %596 = vperm.xlu0 %595, %v551
        %v597 = vpop.permute.xlu0 %596
        %600 = vset.pattern.permute.xlu0 0
        %601 = vperm.xlu0 %600, %v553
        %v602 = vpop.permute.xlu0 %601
        %605 = vset.pattern.permute.xlu0 0
        %606 = vperm.xlu0 %605, %v555
        %v607 = vpop.permute.xlu0 %606
        %610 = vset.pattern.permute.xlu0 0
        %611 = vperm.xlu0 %610, %v557
        %v612 = vpop.permute.xlu0 %611
        %615 = vset.pattern.permute.xlu0 0
        %616 = vperm.xlu0 %615, %v559
        %v617 = vpop.permute.xlu0 %616
        %620 = vset.pattern.permute.xlu0 0
        %621 = vperm.xlu0 %620, %v561
        %v622 = vpop.permute.xlu0 %621
        %625 = vset.pattern.permute.xlu0 0
        %626 = vperm.xlu0 %625, %v563
        %v627 = vpop.permute.xlu0 %626
        %630 = vset.pattern.permute.xlu0 0
        %631 = vperm.xlu0 %630, %v565
        %v632 = vpop.permute.xlu0 %631
        %635 = vset.pattern.permute.xlu0 0
        %636 = vperm.xlu0 %635, %v567
        %v637 = vpop.permute.xlu0 %636
        %640 = vset.pattern.permute.xlu0 0
        %641 = vperm.xlu0 %640, %v569
        %v642 = vpop.permute.xlu0 %641
        %645 = vset.pattern.permute.xlu0 0
        %646 = vperm.xlu0 %645, %v571
        %v647 = vpop.permute.xlu0 %646
        %650 = vset.pattern.permute.xlu0 0
        %651 = vperm.xlu0 %650, %v573
        %v652 = vpop.permute.xlu0 %651
        %v654 = vmul.f32 %v366, %v577
        %v655 = vmul.f32 %v368, %v582
        %v656 = vmul.f32 %v370, %v587
        %v657 = vmul.f32 %v372, %v592
        %v658 = vmul.f32 %v374, %v597
        %v659 = vmul.f32 %v376, %v602
        %v660 = vmul.f32 %v378, %v607
        %v661 = vmul.f32 %v380, %v612
        %v662 = vmul.f32 %v382, %v617
        %v663 = vmul.f32 %v384, %v622
        %v664 = vmul.f32 %v386, %v627
        %v665 = vmul.f32 %v388, %v632
        %v666 = vmul.f32 %v390, %v637
        %v667 = vmul.f32 %v392, %v642
        %v668 = vmul.f32 %v394, %v647
        %v669 = vmul.f32 %v396, %v652
        %v670 = vld [vmem:[%s248] sm:$0xff]
        %671 = vmatprep.subr.mxu0 0.0
        %672 = vmatpush1.msra.mxu0 %v669
        %673 = vmatprep.subr.mxu0 0.0
        %674 = vmatpush1.msra.mxu0 %v668
        %675 = vmatprep.subr.mxu0 0.0
        %676 = vmatpush1.msra.mxu0 %v667
        %677 = vmatprep.subr.mxu0 0.0
        %678 = vmatpush1.msra.mxu0 %v666
        %679 = vmatprep.subr.mxu0 0.0
        %680 = vmatpush1.msra.mxu0 %v665
        %681 = vmatprep.subr.mxu0 0.0
        %682 = vmatpush1.msra.mxu0 %v664
        %683 = vmatprep.subr.mxu0 0.0
        %684 = vmatpush1.msra.mxu0 %v663
        %685 = vmatprep.subr.mxu0 0.0
        %686 = vmatpush1.msra.mxu0 %v662
        %687 = vmatprep.subr.mxu0 0.0
        %688 = vmatpush1.msra.mxu0 %v661
        %689 = vmatprep.subr.mxu0 0.0
        %690 = vmatpush1.msra.mxu0 %v660
        %691 = vmatprep.subr.mxu0 0.0
        %692 = vmatpush1.msra.mxu0 %v659
        %693 = vmatprep.subr.mxu0 0.0
        %694 = vmatpush1.msra.mxu0 %v658
        %695 = vmatprep.subr.mxu0 0.0
        %696 = vmatpush1.msra.mxu0 %v657
        %697 = vmatprep.subr.mxu0 0.0
        %698 = vmatpush1.msra.mxu0 %v656
        %699 = vmatprep.subr.mxu0 0.0
        %700 = vmatpush1.msra.mxu0 %v655
        %701 = vmatprep.subr.mxu0 0.0
        %702 = vmatpush1.msra.mxu0 %v654
        %703 = vmatprep.subr.mxu0 0.0
        %704 = vmatpush2.msra.mxu0 0.0
        %705 = vmatprep.subr.mxu0 0.0
        %706 = vmatpush2.msra.mxu0 0.0
        %707 = vmatprep.subr.mxu0 0.0
        %708 = vmatpush2.msra.mxu0 0.0
        %709 = vmatprep.subr.mxu0 0.0
        %710 = vmatpush2.msra.mxu0 0.0
        %711 = vmatprep.subr.mxu0 0.0
        %712 = vmatpush2.msra.mxu0 0.0
        %713 = vmatprep.subr.mxu0 0.0
        %714 = vmatpush2.msra.mxu0 0.0
        %715 = vmatprep.subr.mxu0 0.0
        %716 = vmatpush2.msra.mxu0 0.0
        %717 = vmatprep.subr.mxu0 0.0
        %718 = vmatpush2.msra.mxu0 0.0
        %719 = vmatprep.subr.mxu0 0.0
        %720 = vmatpush2.msra.mxu0 0.0
        %721 = vmatprep.subr.mxu0 0.0
        %722 = vmatpush2.msra.mxu0 0.0
        %723 = vmatprep.subr.mxu0 0.0
        %724 = vmatpush2.msra.mxu0 0.0
        %725 = vmatprep.subr.mxu0 0.0
        %726 = vmatpush2.msra.mxu0 0.0
        %727 = vmatprep.subr.mxu0 0.0
        %728 = vmatpush2.msra.mxu0 0.0
        %729 = vmatprep.subr.mxu0 0.0
        %730 = vmatpush2.msra.mxu0 0.0
        %731 = vmatprep.subr.mxu0 0.0
        %732 = vmatpush2.msra.mxu0 0.0
        %733 = vmatprep.subr.mxu0 0.0
        %734 = vmatpush2.msra.mxu0 0.0
        %735 = vmatprep.mubr.f32.mxu0 0.0
        %736 = vmatmul.mubr.f32.gmra.mxu0 %v670
        %v737 = vpop.f32.mrf.mxu0
        %v738 = vadd.f32 0.0, %v737
        %v739 = vpop.f32.mrf.mxu0
        %740 = vdwg.mxu0
        %v741 = vld [vmem:[%s296] sm:$0x1]
        %vm742 = vcmask 1040384
        %v743 = vsel %vm742, %v741, -inf
        %744 = vmax.xlane.f32.xlu0 %v743
        %v745 = vpop.xlane.xlu0 %744
        %v746 = vsub.f32 %v741, %v745
        %v747 = vmul.f32 %v746, 1.442695
        %v748 = vpow.pop %v747
        %v749 = vsel %vm742, %v748, 0.0
        %750 = vadd.xlane.f32.xlu0 %v749
        %v751 = vpop.xlane.xlu0 %750
        %v752 = vrcp.pop %v751
        %v753 = vmul.f32 %v748, %v752
        %v754 = vld [vmem:[%s239] sm:$0xff]
        %v755 = vsub.f32 %v738, %v754
        %v757 = vlaneseq
        %v758 = vshrl.u32 %v757, 7
        %v759 = vsub.s32 0, %v758
        %v760 = vrot.slane %v753, %v759
        %v762 = vmul.f32 %v760, %v755
        %v763 = vadd.f32 %v754, %v762
        %764 = vst [vmem:[%s300] sm:$0xff] %v763
        %p765 = scmp.lt.s32.totalorder %s21, 3
        %s766 = scalar_select %p765, %s21, 3
        %s767 = smul.addr %s766, 8
        %s768 = scalar_lea.vmem %s4, %s767
        // Predicated region
        $region49: #{continuous_problem_forward.1} parent=35 // pred_check
          %p769 = pneg %p143
        $region50: #{continuous_problem_forward.1} parent=35 // pred_check_branch
          %771 = sbr.rel (%p769) target = $region52
        $region51: #{continuous_problem_forward.1} parent=35 // pred_region
          _
        $region52: #{continuous_problem_forward.1} parent=35 // pred_fallthru
          _
      $region36: #{continuous_problem_forward.1} parent=5 // pred_fallthru
        _
      %p772 = scmp.le.s32.totalorder 2, %s16
      // Predicated region
      $region53: #{continuous_problem_forward.1} parent=5 // pred_check
        %p773 = pneg %p772
      $region54: #{continuous_problem_forward.1} parent=5 // pred_check_branch
        %775 = sbr.rel (%p773) target = $region56
      $region55: #{continuous_problem_forward.1} parent=5 // pred_region
        %s776 = ssub.s32 %s16, 2
        // Predicated region
        $region57: #{continuous_problem_forward.1} parent=55 // pred_check
          %p777 = pneg %p149
        $region58: #{continuous_problem_forward.1} parent=55 // pred_check_branch
          %779 = sbr.rel (%p777) target = $region60
        $region59: #{continuous_problem_forward.1} parent=55 // pred_region
          %p780 = scmp.lt.s32.totalorder %s22, 3
          %s781 = scalar_select %p780, %s22, 3
          %s782 = smul.addr %s781, 8
          %s783 = scalar_lea.vmem %s4, %s782
        $region60: #{continuous_problem_forward.1} parent=55 // pred_fallthru
          _
      $region56: #{continuous_problem_forward.1} parent=5 // pred_fallthru
        _
    $region6: #{continuous_problem_forward.1} parent=1 // loop_footer
      %s20 = sadd.s32 1, %s16
    $region7: #{continuous_problem_forward.1} parent=1 // loop_footer_branch
      %15 = sbr.rel target = $region3
    $region8: #{continuous_problem_forward.1} parent=1 // loop_exit
      _
    %784 = vsyncpa [#allocation3], 1
    %s785 = scalar_lea.sflag [#allocation3], 1
    %786 = vsyncpa %s785, 1
    %787 = vsyncpa [#allocation5], 1
    %s788 = scalar_lea.sflag [#allocation5], 1
    %789 = vsyncpa %s788, 1

</llo_original>
